<compile_context>
chip_gen: v7x
topology: tpu7x:2x2x1
jax: 0.10.0
libtpu: 0.0.40
codegen_flags: <defaults>
</compile_context>

<pallas_src>
import jax
import jax.numpy as jnp
from jax.experimental import pallas as pl
from jax.experimental.pallas import tpu as pltpu


def linear_kernel(w_ref, x_ref, y_ref):
    # w_ref: (O, K) f32 in SMEM -- read as scalars (original nn.Linear layout,
    #        no transpose anywhere).
    # x_ref: (B, K) bf16 in VMEM.
    # y_ref: (B, O) bf16 in VMEM.
    O, K = w_ref.shape
    x = x_ref[...].astype(jnp.float32)          # cast up once, accumulate in f32
    cols = []
    for o in range(O):                          # static unroll, O = 2
        acc = w_ref[o, 0] * x[:, 0:1]           # scalar (sreg) * vector on the VPU
        for k in range(1, K):                   # static unroll, K = 3
            acc = acc + w_ref[o, k] * x[:, k:k + 1]
        cols.append(acc)                        # (B, 1) f32
    y_ref[...] = jnp.concatenate(cols, axis=1).astype(y_ref.dtype)


def linear_pallas(x, w):
    """y = x @ w.T   (x: (B, K) bf16, w: (O, K) bf16, y: (B, O) bf16)."""
    B, K = x.shape
    O, K2 = w.shape
    assert K == K2
    # 6 weight values -> f32 so they live as SMEM words (scalar operands).
    w_f32 = w.astype(jnp.float32)
    return pl.pallas_call(
        linear_kernel,
        out_shape=jax.ShapeDtypeStruct((B, O), x.dtype),
        in_specs=[
            pl.BlockSpec(memory_space=pltpu.MemorySpace.SMEM),   # weights (scalars)
            pl.BlockSpec(memory_space=pltpu.MemorySpace.VMEM),   # activations
        ],
        out_specs=pl.BlockSpec(memory_space=pltpu.MemorySpace.VMEM),
    )(w_f32, x)


if __name__ == "__main__":
    key = jax.random.PRNGKey(0)
    kx, kw = jax.random.split(key)

    # Weight mirrors torch.rand(2, 3, dtype=bfloat16); then linear[0, 0] = inf.
    w = jax.random.uniform(kw, (2, 3), dtype=jnp.float32).astype(jnp.bfloat16)
    w = w.at[0, 0].set(jnp.inf)

    # Input consistent with in_features = 3.  B = 128 fills one sublane tile.
    # Strictly-positive inputs so the inf weight propagates as inf (not NaN).
    B = 128
    x = jax.random.uniform(
        kx, (B, 3), dtype=jnp.float32, minval=0.25, maxval=1.0
    ).astype(jnp.bfloat16)

    y = linear_pallas(x, w)
    jax.block_until_ready(y)

    assert y.shape == (B, 2)
    # Row 0 of the weight has +inf at [0, 0]; positive inputs => first output
    # feature is +inf for every batch row, second feature stays finite.
    assert bool(jnp.all(jnp.isinf(y[:, 0].astype(jnp.float32))))
    assert bool(jnp.all(jnp.isfinite(y[:, 1].astype(jnp.float32))))

    # Cross-check the finite column against a plain-JAX reference.
    y_ref = (x.astype(jnp.float32) @ w.astype(jnp.float32).T).astype(jnp.bfloat16)
    assert bool(
        jnp.allclose(
            y[:, 1].astype(jnp.float32),
            y_ref[:, 1].astype(jnp.float32),
            rtol=2e-2,
            atol=2e-2,
        )
    )

    print("KERNEL_OK")
</pallas_src>

<mosaic_0001>
module attributes {stable_mosaic.version = 11 : i64} {
  func.func @linear_kernel(%arg0: memref<2x3xf32, #tpu.memory_space<smem>>, %arg1: memref<128x3xbf16, #tpu.memory_space<vmem>>, %arg2: memref<128x2xbf16, #tpu.memory_space<vmem>>) attributes {dimension_semantics = [], scalar_prefetch = 0 : i64, scratch_operands = 0 : i64, tpu.core_type = #tpu.core_type<tc>} {
    %c0 = arith.constant 0 : index
    %c0_0 = arith.constant 0 : index
    %0 = vector.load %arg1[%c0, %c0_0] : memref<128x3xbf16, #tpu.memory_space<vmem>>, vector<128x3xbf16>
    %1 = arith.extf %0 : vector<128x3xbf16> to vector<128x3xf32>
    %c0_1 = arith.constant 0 : index
    %c0_2 = arith.constant 0 : index
    %2 = memref.load %arg0[%c0_1, %c0_2] : memref<2x3xf32, #tpu.memory_space<smem>>
    %3 = vector.extract_strided_slice %1 {offsets = [0, 0], sizes = [128, 1], strides = [1, 1]} : vector<128x3xf32> to vector<128x1xf32>
    %4 = vector.broadcast %2 : f32 to vector<128x1xf32>
    %5 = arith.mulf %4, %3 : vector<128x1xf32>
    %c0_3 = arith.constant 0 : index
    %c1 = arith.constant 1 : index
    %6 = memref.load %arg0[%c0_3, %c1] : memref<2x3xf32, #tpu.memory_space<smem>>
    %7 = vector.extract_strided_slice %1 {offsets = [0, 1], sizes = [128, 1], strides = [1, 1]} : vector<128x3xf32> to vector<128x1xf32>
    %8 = vector.broadcast %6 : f32 to vector<128x1xf32>
    %9 = arith.mulf %8, %7 : vector<128x1xf32>
    %10 = arith.addf %5, %9 : vector<128x1xf32>
    %c0_4 = arith.constant 0 : index
    %c2 = arith.constant 2 : index
    %11 = memref.load %arg0[%c0_4, %c2] : memref<2x3xf32, #tpu.memory_space<smem>>
    %12 = vector.extract_strided_slice %1 {offsets = [0, 2], sizes = [128, 1], strides = [1, 1]} : vector<128x3xf32> to vector<128x1xf32>
    %13 = vector.broadcast %11 : f32 to vector<128x1xf32>
    %14 = arith.mulf %13, %12 : vector<128x1xf32>
    %15 = arith.addf %10, %14 : vector<128x1xf32>
    %c1_5 = arith.constant 1 : index
    %c0_6 = arith.constant 0 : index
    %16 = memref.load %arg0[%c1_5, %c0_6] : memref<2x3xf32, #tpu.memory_space<smem>>
    %17 = vector.extract_strided_slice %1 {offsets = [0, 0], sizes = [128, 1], strides = [1, 1]} : vector<128x3xf32> to vector<128x1xf32>
    %18 = vector.broadcast %16 : f32 to vector<128x1xf32>
    %19 = arith.mulf %18, %17 : vector<128x1xf32>
    %c1_7 = arith.constant 1 : index
    %c1_8 = arith.constant 1 : index
    %20 = memref.load %arg0[%c1_7, %c1_8] : memref<2x3xf32, #tpu.memory_space<smem>>
    %21 = vector.extract_strided_slice %1 {offsets = [0, 1], sizes = [128, 1], strides = [1, 1]} : vector<128x3xf32> to vector<128x1xf32>
    %22 = vector.broadcast %20 : f32 to vector<128x1xf32>
    %23 = arith.mulf %22, %21 : vector<128x1xf32>
    %24 = arith.addf %19, %23 : vector<128x1xf32>
    %c1_9 = arith.constant 1 : index
    %c2_10 = arith.constant 2 : index
    %25 = memref.load %arg0[%c1_9, %c2_10] : memref<2x3xf32, #tpu.memory_space<smem>>
    %26 = vector.extract_strided_slice %1 {offsets = [0, 2], sizes = [128, 1], strides = [1, 1]} : vector<128x3xf32> to vector<128x1xf32>
    %27 = vector.broadcast %25 : f32 to vector<128x1xf32>
    %28 = arith.mulf %27, %26 : vector<128x1xf32>
    %29 = arith.addf %24, %28 : vector<128x1xf32>
    %30 = tpu.concatenate %15, %29 in 1 : vector<128x1xf32>, vector<128x1xf32> -> vector<128x2xf32>
    %31 = arith.truncf %30 : vector<128x2xf32> to vector<128x2xbf16>
    %c0_11 = arith.constant 0 : index
    %c0_12 = arith.constant 0 : index
    %32 = vector.load %arg2[%c0_11, %c0_12] : memref<128x2xbf16, #tpu.memory_space<vmem>>, vector<128x2xbf16>
    tpu.vector_store %arg2[%c0_11, %c0_12], %31 {strides = array<i32>} : memref<128x2xbf16, #tpu.memory_space<vmem>>, vector<128x2xbf16>,
    return
  }
}

</mosaic_0001>

<llo_original>
// kernel: tpu_custom_call.1
$region0: #{tpu_custom_call.1}
  #allocation0 [shape = 'u32[]', space=smem, size = 0x4, offset = 0x4, fixed_abs, tag = 'smem constant byte address 0x4 - core index']
  #allocation1 [shape = 'u32[144,128]{1,0:T(1,128)}', space=vmem, size = 0x12000, scoped, tag = 'internal scratch']
  %s0 = inlined_call_operand.vmem [shape: f32[2,3], index: 0, kind: input, shape index: {}]
  %s1 = inlined_call_operand.vmem [shape: bf16[128,3], index: 1, kind: input, shape index: {}]
  %s2 = inlined_call_operand.vmem [shape: bf16[128,2], index: 2, kind: output, shape index: {}]
  %s3 = sld [smem:[#allocation0]]
  $region22: #{tpu_custom_call.1} parent=0
    _
  %s5 = ssub.s32 1, %s3
  %s6 = scalar_select 0, %s5, %s3
  $region1: #{tpu_custom_call.1} parent=0
    #allocation2 [shape = 'u8[1024]{0}', space=smem, size = 0x400, scoped, tag = 'input window, operand 0, single buffered']
    #allocation3 [shape = 's32[1]{0}', space=sflag, size = 0x4, scoped, tag = 'scoped memory for tpu_custom_call.1']
    %7 = vsyncpa [#allocation3], 0
    // Predicated region
    $region2: #{tpu_custom_call.1} parent=1 // pred_check
      _
    $region3: #{tpu_custom_call.1} parent=1 // pred_check_branch
      %9 = sbr.rel (0) target = $region5
    $region4: #{tpu_custom_call.1} parent=1 // pred_region
      %s11 = ssub.s32 32, 32
      %12 = vsyncadd [#allocation3], %s11
      %s14 = sshll.u32 %s0, 4
      %s15 = int_to_ptr.vmem [resolvable:$true] %s14
      %17 = dma.vmem_to_smem %s15, 32, [#allocation2], [#allocation3]
    $region5: #{tpu_custom_call.1} parent=1 // pred_fallthru
      _
    // Predicated region
    $region6: #{tpu_custom_call.1} parent=1 // pred_check
      _
    $region7: #{tpu_custom_call.1} parent=1 // pred_check_branch
      %19 = sbr.rel (0) target = $region9
    $region8: #{tpu_custom_call.1} parent=1 // pred_region
      _
    $region9: #{tpu_custom_call.1} parent=1 // pred_fallthru
      _
    // Predicated region
    $region10: #{tpu_custom_call.1} parent=1 // pred_check
      _
    $region11: #{tpu_custom_call.1} parent=1 // pred_check_branch
      %21 = sbr.rel (0) target = $region13
    $region12: #{tpu_custom_call.1} parent=1 // pred_region
      %22 = dma.done [#allocation3], 32
    $region13: #{tpu_custom_call.1} parent=1 // pred_fallthru
      _
    %23 = sfence
    %v24 = vld [vmem:[%s1] sm:$0xf]
    %v25 = vld [vmem:[%s1 + $0x4] sm:$0xf]
    %v26 = vld [vmem:[%s1 + $0x8] sm:$0xf]
    %v27 = vld [vmem:[%s1 + $0xc] sm:$0xf]
    %v28 = vld [vmem:[%s1 + $0x10] sm:$0xf]
    %v29 = vld [vmem:[%s1 + $0x14] sm:$0xf]
    %v30 = vld [vmem:[%s1 + $0x18] sm:$0xf]
    %v31 = vld [vmem:[%s1 + $0x1c] sm:$0xf]
    %v32 = vld [vmem:[%s1 + $0x20] sm:$0xf]
    %v33 = vld [vmem:[%s1 + $0x24] sm:$0xf]
    %v34 = vld [vmem:[%s1 + $0x28] sm:$0xf]
    %v35 = vld [vmem:[%s1 + $0x2c] sm:$0xf]
    %v36 = vld [vmem:[%s1 + $0x30] sm:$0xf]
    %v37 = vld [vmem:[%s1 + $0x34] sm:$0xf]
    %v38 = vld [vmem:[%s1 + $0x38] sm:$0xf]
    %v39 = vld [vmem:[%s1 + $0x3c] sm:$0xf]
    %v40 = vunpack.c.l.bf16 %v24
    %v41 = vunpack.c.l.bf16 %v25
    %v42 = vunpack.c.l.bf16 %v26
    %v43 = vunpack.c.l.bf16 %v27
    %v44 = vunpack.c.l.bf16 %v28
    %v45 = vunpack.c.l.bf16 %v29
    %v46 = vunpack.c.l.bf16 %v30
    %v47 = vunpack.c.l.bf16 %v31
    %v48 = vunpack.c.l.bf16 %v32
    %v49 = vunpack.c.l.bf16 %v33
    %v50 = vunpack.c.l.bf16 %v34
    %v51 = vunpack.c.l.bf16 %v35
    %v52 = vunpack.c.l.bf16 %v36
    %v53 = vunpack.c.l.bf16 %v37
    %v54 = vunpack.c.l.bf16 %v38
    %v55 = vunpack.c.l.bf16 %v39
    %s56 = sld [smem:[#allocation2]]
    %v57 = vstv %s56
    %v58 = vmul.f32 %v57, %v40
    %v59 = vmul.f32 %v57, %v41
    %v60 = vmul.f32 %v57, %v42
    %v61 = vmul.f32 %v57, %v43
    %v62 = vmul.f32 %v57, %v44
    %v63 = vmul.f32 %v57, %v45
    %v64 = vmul.f32 %v57, %v46
    %v65 = vmul.f32 %v57, %v47
    %v66 = vmul.f32 %v57, %v48
    %v67 = vmul.f32 %v57, %v49
    %v68 = vmul.f32 %v57, %v50
    %v69 = vmul.f32 %v57, %v51
    %v70 = vmul.f32 %v57, %v52
    %v71 = vmul.f32 %v57, %v53
    %v72 = vmul.f32 %v57, %v54
    %v73 = vmul.f32 %v57, %v55
    %s74 = sld [smem:[#allocation2 + $0x1]]
    %v75 = vstv %s74
    %v76 = vmul.f32 %v75, %v40
    %v77 = vmul.f32 %v75, %v41
    %v78 = vmul.f32 %v75, %v42
    %v79 = vmul.f32 %v75, %v43
    %v80 = vmul.f32 %v75, %v44
    %v81 = vmul.f32 %v75, %v45
    %v82 = vmul.f32 %v75, %v46
    %v83 = vmul.f32 %v75, %v47
    %v84 = vmul.f32 %v75, %v48
    %v85 = vmul.f32 %v75, %v49
    %v86 = vmul.f32 %v75, %v50
    %v87 = vmul.f32 %v75, %v51
    %v88 = vmul.f32 %v75, %v52
    %v89 = vmul.f32 %v75, %v53
    %v90 = vmul.f32 %v75, %v54
    %v91 = vmul.f32 %v75, %v55
    %108 = vrot.lane.b32.xlu0 %v76, 127
    %v109 = vpop.permute.xlu0 %108
    %110 = vrot.lane.b32.xlu0 %v77, 127
    %v111 = vpop.permute.xlu0 %110
    %112 = vrot.lane.b32.xlu0 %v78, 127
    %v113 = vpop.permute.xlu0 %112
    %114 = vrot.lane.b32.xlu0 %v79, 127
    %v115 = vpop.permute.xlu0 %114
    %116 = vrot.lane.b32.xlu0 %v80, 127
    %v117 = vpop.permute.xlu0 %116
    %118 = vrot.lane.b32.xlu0 %v81, 127
    %v119 = vpop.permute.xlu0 %118
    %120 = vrot.lane.b32.xlu0 %v82, 127
    %v121 = vpop.permute.xlu0 %120
    %122 = vrot.lane.b32.xlu0 %v83, 127
    %v123 = vpop.permute.xlu0 %122
    %124 = vrot.lane.b32.xlu0 %v84, 127
    %v125 = vpop.permute.xlu0 %124
    %126 = vrot.lane.b32.xlu0 %v85, 127
    %v127 = vpop.permute.xlu0 %126
    %128 = vrot.lane.b32.xlu0 %v86, 127
    %v129 = vpop.permute.xlu0 %128
    %130 = vrot.lane.b32.xlu0 %v87, 127
    %v131 = vpop.permute.xlu0 %130
    %132 = vrot.lane.b32.xlu0 %v88, 127
    %v133 = vpop.permute.xlu0 %132
    %134 = vrot.lane.b32.xlu0 %v89, 127
    %v135 = vpop.permute.xlu0 %134
    %136 = vrot.lane.b32.xlu0 %v90, 127
    %v137 = vpop.permute.xlu0 %136
    %138 = vrot.lane.b32.xlu0 %v91, 127
    %v139 = vpop.permute.xlu0 %138
    %v156 = vadd.f32 %v58, %v109
    %v157 = vadd.f32 %v59, %v111
    %v158 = vadd.f32 %v60, %v113
    %v159 = vadd.f32 %v61, %v115
    %v160 = vadd.f32 %v62, %v117
    %v161 = vadd.f32 %v63, %v119
    %v162 = vadd.f32 %v64, %v121
    %v163 = vadd.f32 %v65, %v123
    %v164 = vadd.f32 %v66, %v125
    %v165 = vadd.f32 %v67, %v127
    %v166 = vadd.f32 %v68, %v129
    %v167 = vadd.f32 %v69, %v131
    %v168 = vadd.f32 %v70, %v133
    %v169 = vadd.f32 %v71, %v135
    %v170 = vadd.f32 %v72, %v137
    %v171 = vadd.f32 %v73, %v139
    %s172 = sld [smem:[#allocation2 + $0x2]]
    %v173 = vstv %s172
    %v174 = vmul.f32 %v173, %v40
    %v175 = vmul.f32 %v173, %v41
    %v176 = vmul.f32 %v173, %v42
    %v177 = vmul.f32 %v173, %v43
    %v178 = vmul.f32 %v173, %v44
    %v179 = vmul.f32 %v173, %v45
    %v180 = vmul.f32 %v173, %v46
    %v181 = vmul.f32 %v173, %v47
    %v182 = vmul.f32 %v173, %v48
    %v183 = vmul.f32 %v173, %v49
    %v184 = vmul.f32 %v173, %v50
    %v185 = vmul.f32 %v173, %v51
    %v186 = vmul.f32 %v173, %v52
    %v187 = vmul.f32 %v173, %v53
    %v188 = vmul.f32 %v173, %v54
    %v189 = vmul.f32 %v173, %v55
    %206 = vrot.lane.b32.xlu0 %v174, 126
    %v207 = vpop.permute.xlu0 %206
    %208 = vrot.lane.b32.xlu0 %v175, 126
    %v209 = vpop.permute.xlu0 %208
    %210 = vrot.lane.b32.xlu0 %v176, 126
    %v211 = vpop.permute.xlu0 %210
    %212 = vrot.lane.b32.xlu0 %v177, 126
    %v213 = vpop.permute.xlu0 %212
    %214 = vrot.lane.b32.xlu0 %v178, 126
    %v215 = vpop.permute.xlu0 %214
    %216 = vrot.lane.b32.xlu0 %v179, 126
    %v217 = vpop.permute.xlu0 %216
    %218 = vrot.lane.b32.xlu0 %v180, 126
    %v219 = vpop.permute.xlu0 %218
    %220 = vrot.lane.b32.xlu0 %v181, 126
    %v221 = vpop.permute.xlu0 %220
    %222 = vrot.lane.b32.xlu0 %v182, 126
    %v223 = vpop.permute.xlu0 %222
    %224 = vrot.lane.b32.xlu0 %v183, 126
    %v225 = vpop.permute.xlu0 %224
    %226 = vrot.lane.b32.xlu0 %v184, 126
    %v227 = vpop.permute.xlu0 %226
    %228 = vrot.lane.b32.xlu0 %v185, 126
    %v229 = vpop.permute.xlu0 %228
    %230 = vrot.lane.b32.xlu0 %v186, 126
    %v231 = vpop.permute.xlu0 %230
    %232 = vrot.lane.b32.xlu0 %v187, 126
    %v233 = vpop.permute.xlu0 %232
    %234 = vrot.lane.b32.xlu0 %v188, 126
    %v235 = vpop.permute.xlu0 %234
    %236 = vrot.lane.b32.xlu0 %v189, 126
    %v237 = vpop.permute.xlu0 %236
    %v254 = vadd.f32 %v156, %v207
    %v255 = vadd.f32 %v157, %v209
    %v256 = vadd.f32 %v158, %v211
    %v257 = vadd.f32 %v159, %v213
    %v258 = vadd.f32 %v160, %v215
    %v259 = vadd.f32 %v161, %v217
    %v260 = vadd.f32 %v162, %v219
    %v261 = vadd.f32 %v163, %v221
    %v262 = vadd.f32 %v164, %v223
    %v263 = vadd.f32 %v165, %v225
    %v264 = vadd.f32 %v166, %v227
    %v265 = vadd.f32 %v167, %v229
    %v266 = vadd.f32 %v168, %v231
    %v267 = vadd.f32 %v169, %v233
    %v268 = vadd.f32 %v170, %v235
    %v269 = vadd.f32 %v171, %v237
    %s270 = sld [smem:[#allocation2 + $0x80]]
    %v271 = vstv %s270
    %v272 = vmul.f32 %v271, %v40
    %v273 = vmul.f32 %v271, %v41
    %v274 = vmul.f32 %v271, %v42
    %v275 = vmul.f32 %v271, %v43
    %v276 = vmul.f32 %v271, %v44
    %v277 = vmul.f32 %v271, %v45
    %v278 = vmul.f32 %v271, %v46
    %v279 = vmul.f32 %v271, %v47
    %v280 = vmul.f32 %v271, %v48
    %v281 = vmul.f32 %v271, %v49
    %v282 = vmul.f32 %v271, %v50
    %v283 = vmul.f32 %v271, %v51
    %v284 = vmul.f32 %v271, %v52
    %v285 = vmul.f32 %v271, %v53
    %v286 = vmul.f32 %v271, %v54
    %v287 = vmul.f32 %v271, %v55
    %s288 = sld [smem:[#allocation2 + $0x81]]
    %v289 = vstv %s288
    %v290 = vmul.f32 %v289, %v40
    %v291 = vmul.f32 %v289, %v41
    %v292 = vmul.f32 %v289, %v42
    %v293 = vmul.f32 %v289, %v43
    %v294 = vmul.f32 %v289, %v44
    %v295 = vmul.f32 %v289, %v45
    %v296 = vmul.f32 %v289, %v46
    %v297 = vmul.f32 %v289, %v47
    %v298 = vmul.f32 %v289, %v48
    %v299 = vmul.f32 %v289, %v49
    %v300 = vmul.f32 %v289, %v50
    %v301 = vmul.f32 %v289, %v51
    %v302 = vmul.f32 %v289, %v52
    %v303 = vmul.f32 %v289, %v53
    %v304 = vmul.f32 %v289, %v54
    %v305 = vmul.f32 %v289, %v55
    %322 = vrot.lane.b32.xlu0 %v290, 127
    %v323 = vpop.permute.xlu0 %322
    %324 = vrot.lane.b32.xlu0 %v291, 127
    %v325 = vpop.permute.xlu0 %324
    %326 = vrot.lane.b32.xlu0 %v292, 127
    %v327 = vpop.permute.xlu0 %326
    %328 = vrot.lane.b32.xlu0 %v293, 127
    %v329 = vpop.permute.xlu0 %328
    %330 = vrot.lane.b32.xlu0 %v294, 127
    %v331 = vpop.permute.xlu0 %330
    %332 = vrot.lane.b32.xlu0 %v295, 127
    %v333 = vpop.permute.xlu0 %332
    %334 = vrot.lane.b32.xlu0 %v296, 127
    %v335 = vpop.permute.xlu0 %334
    %336 = vrot.lane.b32.xlu0 %v297, 127
    %v337 = vpop.permute.xlu0 %336
    %338 = vrot.lane.b32.xlu0 %v298, 127
    %v339 = vpop.permute.xlu0 %338
    %340 = vrot.lane.b32.xlu0 %v299, 127
    %v341 = vpop.permute.xlu0 %340
    %342 = vrot.lane.b32.xlu0 %v300, 127
    %v343 = vpop.permute.xlu0 %342
    %344 = vrot.lane.b32.xlu0 %v301, 127
    %v345 = vpop.permute.xlu0 %344
    %346 = vrot.lane.b32.xlu0 %v302, 127
    %v347 = vpop.permute.xlu0 %346
    %348 = vrot.lane.b32.xlu0 %v303, 127
    %v349 = vpop.permute.xlu0 %348
    %350 = vrot.lane.b32.xlu0 %v304, 127
    %v351 = vpop.permute.xlu0 %350
    %352 = vrot.lane.b32.xlu0 %v305, 127
    %v353 = vpop.permute.xlu0 %352
    %v370 = vadd.f32 %v272, %v323
    %v371 = vadd.f32 %v273, %v325
    %v372 = vadd.f32 %v274, %v327
    %v373 = vadd.f32 %v275, %v329
    %v374 = vadd.f32 %v276, %v331
    %v375 = vadd.f32 %v277, %v333
    %v376 = vadd.f32 %v278, %v335
    %v377 = vadd.f32 %v279, %v337
    %v378 = vadd.f32 %v280, %v339
    %v379 = vadd.f32 %v281, %v341
    %v380 = vadd.f32 %v282, %v343
    %v381 = vadd.f32 %v283, %v345
    %v382 = vadd.f32 %v284, %v347
    %v383 = vadd.f32 %v285, %v349
    %v384 = vadd.f32 %v286, %v351
    %v385 = vadd.f32 %v287, %v353
    %s386 = sld [smem:[#allocation2 + $0x82]]
    %v387 = vstv %s386
    %v388 = vmul.f32 %v387, %v40
    %v389 = vmul.f32 %v387, %v41
    %v390 = vmul.f32 %v387, %v42
    %v391 = vmul.f32 %v387, %v43
    %v392 = vmul.f32 %v387, %v44
    %v393 = vmul.f32 %v387, %v45
    %v394 = vmul.f32 %v387, %v46
    %v395 = vmul.f32 %v387, %v47
    %v396 = vmul.f32 %v387, %v48
    %v397 = vmul.f32 %v387, %v49
    %v398 = vmul.f32 %v387, %v50
    %v399 = vmul.f32 %v387, %v51
    %v400 = vmul.f32 %v387, %v52
    %v401 = vmul.f32 %v387, %v53
    %v402 = vmul.f32 %v387, %v54
    %v403 = vmul.f32 %v387, %v55
    %420 = vrot.lane.b32.xlu0 %v388, 126
    %v421 = vpop.permute.xlu0 %420
    %422 = vrot.lane.b32.xlu0 %v389, 126
    %v423 = vpop.permute.xlu0 %422
    %424 = vrot.lane.b32.xlu0 %v390, 126
    %v425 = vpop.permute.xlu0 %424
    %426 = vrot.lane.b32.xlu0 %v391, 126
    %v427 = vpop.permute.xlu0 %426
    %428 = vrot.lane.b32.xlu0 %v392, 126
    %v429 = vpop.permute.xlu0 %428
    %430 = vrot.lane.b32.xlu0 %v393, 126
    %v431 = vpop.permute.xlu0 %430
    %432 = vrot.lane.b32.xlu0 %v394, 126
    %v433 = vpop.permute.xlu0 %432
    %434 = vrot.lane.b32.xlu0 %v395, 126
    %v435 = vpop.permute.xlu0 %434
    %436 = vrot.lane.b32.xlu0 %v396, 126
    %v437 = vpop.permute.xlu0 %436
    %438 = vrot.lane.b32.xlu0 %v397, 126
    %v439 = vpop.permute.xlu0 %438
    %440 = vrot.lane.b32.xlu0 %v398, 126
    %v441 = vpop.permute.xlu0 %440
    %442 = vrot.lane.b32.xlu0 %v399, 126
    %v443 = vpop.permute.xlu0 %442
    %444 = vrot.lane.b32.xlu0 %v400, 126
    %v445 = vpop.permute.xlu0 %444
    %446 = vrot.lane.b32.xlu0 %v401, 126
    %v447 = vpop.permute.xlu0 %446
    %448 = vrot.lane.b32.xlu0 %v402, 126
    %v449 = vpop.permute.xlu0 %448
    %450 = vrot.lane.b32.xlu0 %v403, 126
    %v451 = vpop.permute.xlu0 %450
    %v468 = vadd.f32 %v370, %v421
    %v469 = vadd.f32 %v371, %v423
    %v470 = vadd.f32 %v372, %v425
    %v471 = vadd.f32 %v373, %v427
    %v472 = vadd.f32 %v374, %v429
    %v473 = vadd.f32 %v375, %v431
    %v474 = vadd.f32 %v376, %v433
    %v475 = vadd.f32 %v377, %v435
    %v476 = vadd.f32 %v378, %v437
    %v477 = vadd.f32 %v379, %v439
    %v478 = vadd.f32 %v380, %v441
    %v479 = vadd.f32 %v381, %v443
    %v480 = vadd.f32 %v382, %v445
    %v481 = vadd.f32 %v383, %v447
    %v482 = vadd.f32 %v384, %v449
    %v483 = vadd.f32 %v385, %v451
    %500 = vrot.lane.b32.xlu0 %v468, 1
    %v501 = vpop.permute.xlu0 %500
    %502 = vrot.lane.b32.xlu0 %v469, 1
    %v503 = vpop.permute.xlu0 %502
    %504 = vrot.lane.b32.xlu0 %v470, 1
    %v505 = vpop.permute.xlu0 %504
    %506 = vrot.lane.b32.xlu0 %v471, 1
    %v507 = vpop.permute.xlu0 %506
    %508 = vrot.lane.b32.xlu0 %v472, 1
    %v509 = vpop.permute.xlu0 %508
    %510 = vrot.lane.b32.xlu0 %v473, 1
    %v511 = vpop.permute.xlu0 %510
    %512 = vrot.lane.b32.xlu0 %v474, 1
    %v513 = vpop.permute.xlu0 %512
    %514 = vrot.lane.b32.xlu0 %v475, 1
    %v515 = vpop.permute.xlu0 %514
    %516 = vrot.lane.b32.xlu0 %v476, 1
    %v517 = vpop.permute.xlu0 %516
    %518 = vrot.lane.b32.xlu0 %v477, 1
    %v519 = vpop.permute.xlu0 %518
    %520 = vrot.lane.b32.xlu0 %v478, 1
    %v521 = vpop.permute.xlu0 %520
    %522 = vrot.lane.b32.xlu0 %v479, 1
    %v523 = vpop.permute.xlu0 %522
    %524 = vrot.lane.b32.xlu0 %v480, 1
    %v525 = vpop.permute.xlu0 %524
    %526 = vrot.lane.b32.xlu0 %v481, 1
    %v527 = vpop.permute.xlu0 %526
    %528 = vrot.lane.b32.xlu0 %v482, 1
    %v529 = vpop.permute.xlu0 %528
    %530 = vrot.lane.b32.xlu0 %v483, 1
    %v531 = vpop.permute.xlu0 %530
    %vm548 = vcmask 7168
    %v549 = vsel %vm548, %v254, %v501
    %v550 = vsel %vm548, %v255, %v503
    %v551 = vsel %vm548, %v256, %v505
    %v552 = vsel %vm548, %v257, %v507
    %v553 = vsel %vm548, %v258, %v509
    %v554 = vsel %vm548, %v259, %v511
    %v555 = vsel %vm548, %v260, %v513
    %v556 = vsel %vm548, %v261, %v515
    %v557 = vsel %vm548, %v262, %v517
    %v558 = vsel %vm548, %v263, %v519
    %v559 = vsel %vm548, %v264, %v521
    %v560 = vsel %vm548, %v265, %v523
    %v561 = vsel %vm548, %v266, %v525
    %v562 = vsel %vm548, %v267, %v527
    %v563 = vsel %vm548, %v268, %v529
    %v564 = vsel %vm548, %v269, %v531
    %v565 = vpack.c.bf16 %v550, %v549
    %v566 = vpack.c.bf16 %v552, %v551
    %v567 = vpack.c.bf16 %v554, %v553
    %v568 = vpack.c.bf16 %v556, %v555
    %v569 = vpack.c.bf16 %v558, %v557
    %v570 = vpack.c.bf16 %v560, %v559
    %v571 = vpack.c.bf16 %v562, %v561
    %v572 = vpack.c.bf16 %v564, %v563
    %v581 = vunpack.c.l.b16 %v565
    %v582 = vunpack.c.h.b16 %v565
    %v583 = vunpack.c.l.b16 %v566
    %v584 = vunpack.c.h.b16 %v566
    %v585 = vunpack.c.l.b16 %v567
    %v586 = vunpack.c.h.b16 %v567
    %v587 = vunpack.c.l.b16 %v568
    %v588 = vunpack.c.h.b16 %v568
    %v589 = vunpack.c.l.b16 %v569
    %v590 = vunpack.c.h.b16 %v569
    %v591 = vunpack.c.l.b16 %v570
    %v592 = vunpack.c.h.b16 %v570
    %v593 = vunpack.c.l.b16 %v571
    %v594 = vunpack.c.h.b16 %v571
    %v595 = vunpack.c.l.b16 %v572
    %v596 = vunpack.c.h.b16 %v572
    %v597 = vpack.c.b16 %v581, %v581
    %v598 = vpack.c.b16 %v582, %v582
    %v599 = vpack.c.b16 %v583, %v583
    %v600 = vpack.c.b16 %v584, %v584
    %v601 = vpack.c.b16 %v585, %v585
    %v602 = vpack.c.b16 %v586, %v586
    %v603 = vpack.c.b16 %v587, %v587
    %v604 = vpack.c.b16 %v588, %v588
    %v605 = vpack.c.b16 %v589, %v589
    %v606 = vpack.c.b16 %v590, %v590
    %v607 = vpack.c.b16 %v591, %v591
    %v608 = vpack.c.b16 %v592, %v592
    %v609 = vpack.c.b16 %v593, %v593
    %v610 = vpack.c.b16 %v594, %v594
    %v611 = vpack.c.b16 %v595, %v595
    %v612 = vpack.c.b16 %v596, %v596
    %vm629 = vcmask 11264
    %630 = vst.msk [vmem:[%s2] sm:$0xf] %vm629, %v597
    %631 = vst.msk [vmem:[%s2 + $0x4] sm:$0xf] %vm629, %v598
    %632 = vst.msk [vmem:[%s2 + $0x8] sm:$0xf] %vm629, %v599
    %633 = vst.msk [vmem:[%s2 + $0xc] sm:$0xf] %vm629, %v600
    %634 = vst.msk [vmem:[%s2 + $0x10] sm:$0xf] %vm629, %v601
    %635 = vst.msk [vmem:[%s2 + $0x14] sm:$0xf] %vm629, %v602
    %636 = vst.msk [vmem:[%s2 + $0x18] sm:$0xf] %vm629, %v603
    %637 = vst.msk [vmem:[%s2 + $0x1c] sm:$0xf] %vm629, %v604
    %638 = vst.msk [vmem:[%s2 + $0x20] sm:$0xf] %vm629, %v605
    %639 = vst.msk [vmem:[%s2 + $0x24] sm:$0xf] %vm629, %v606
    %640 = vst.msk [vmem:[%s2 + $0x28] sm:$0xf] %vm629, %v607
    %641 = vst.msk [vmem:[%s2 + $0x2c] sm:$0xf] %vm629, %v608
    %642 = vst.msk [vmem:[%s2 + $0x30] sm:$0xf] %vm629, %v609
    %643 = vst.msk [vmem:[%s2 + $0x34] sm:$0xf] %vm629, %v610
    %644 = vst.msk [vmem:[%s2 + $0x38] sm:$0xf] %vm629, %v611
    %645 = vst.msk [vmem:[%s2 + $0x3c] sm:$0xf] %vm629, %v612
    // Predicated region
    $region14: #{tpu_custom_call.1} parent=1 // pred_check
      _
    $region15: #{tpu_custom_call.1} parent=1 // pred_check_branch
      %647 = sbr.rel (0) target = $region17
    $region16: #{tpu_custom_call.1} parent=1 // pred_region
      _
    $region17: #{tpu_custom_call.1} parent=1 // pred_fallthru
      _
    // Predicated region
    $region18: #{tpu_custom_call.1} parent=1 // pred_check
      _
    $region19: #{tpu_custom_call.1} parent=1 // pred_check_branch
      %649 = sbr.rel (0) target = $region21
    $region20: #{tpu_custom_call.1} parent=1 // pred_region
      _
    $region21: #{tpu_custom_call.1} parent=1 // pred_fallthru
      _
    %650 = vsyncpa [#allocation3], 1

</llo_original>
